<compile_context>
chip_gen: v7x
topology: tpu7x:2x2x1
jax: 0.10.0
libtpu: 0.0.40
codegen_flags: <defaults>
</compile_context>

<pallas_src>
import jax
import jax.numpy as jnp
from jax.experimental import pallas as pl
from jax.experimental.pallas import tpu as pltpu


# ----------------------------- Pallas kernel --------------------------------
def _reverb_fir_mxu_kernel(x_ref, halo_ref, wroll_ref, whalo_ref, mh_ref, o_ref):
    """Blocked causal FIR via one fused MXU dot:  y = [x | prev] @ [M ; H].

    x_ref:     (tile_R, B)   VMEM bf16 -- B-sample blocks (rows) of the audio
    halo_ref:  (8, B)        VMEM bf16 -- 8-row slab ending just before this
                                          tile; row 7 is the preceding block
    wroll_ref: (tile_R, 1)   VMEM f32  -- weight for the in-tile rolled row
                                          (0 at tile-first rows / channel starts)
    whalo_ref: (tile_R, 1)   VMEM f32  -- weight for the halo row
                                          (1 only at a tile-first, non-channel-
                                          start row)
    mh_ref:    (2B, B)       VMEM bf16 -- stacked [M ; H] Toeplitz of the IR
    o_ref:     (tile_R, B)   VMEM f32
    """
    x_bf = x_ref[...]                                   # (tile_R, B) bf16
    x_f32 = x_bf.astype(jnp.float32)
    # Previous-block row: row r <- x[r-1] (in-tile roll), row 0 <- halo row;
    # both gated by precomputed per-row weights (channel starts -> 0).
    prev = (pltpu.roll(x_f32, 1, 0) * wroll_ref[...]
            + halo_ref[7:8, :].astype(jnp.float32) * whalo_ref[...])
    lhs = jnp.concatenate([x_bf, prev.astype(jnp.bfloat16)], axis=1)  # (tile_R, 2B)
    y = jnp.dot(lhs, mh_ref[...], preferred_element_type=jnp.float32)
    o_ref[...] = y.astype(o_ref.dtype)


def _toeplitz_mats(ir, block):
    """M[j,s] = ir[s-j] (in-block taps); H[p,s] = ir[s+block-p] (carry-in)."""
    L = ir.shape[0]
    j = jnp.arange(block)[:, None]
    s = jnp.arange(block)[None, :]
    d_main = s - j
    M = jnp.where((d_main >= 0) & (d_main < L),
                  ir[jnp.clip(d_main, 0, L - 1)], 0.0)
    d_halo = s + block - j
    H = jnp.where((d_halo >= 0) & (d_halo < L),
                  ir[jnp.clip(d_halo, 0, L - 1)], 0.0)
    return M.astype(jnp.float32), H.astype(jnp.float32)


def _round_up(n, m):
    return -(-n // m) * m


def _default_block():
    """128 on v2-v5 (128-wide MXU), 256 on v6e/v7x (256-wide MXU)."""
    try:
        kind = jax.devices()[0].device_kind.lower()
    except Exception:
        return 128
    for tag in ("v2", "v3", "v4", "v5"):
        if tag in kind:
            return 128
    return 256


def reverb_apply(audio, ir_mixed, *, block=None, max_tile_rows=512):
    """Causal FIR  y[c,t] = sum_k ir_mixed[k] * x[c,t-k]  via the Pallas kernel.

    audio: (C, T) float32.  ir_mixed: (L,) float32 with L <= block.
    """
    audio = audio.astype(jnp.float32)
    C, T = audio.shape
    if block is None:
        block = _default_block()
    L = int(ir_mixed.shape[0])
    if L > block:
        raise ValueError("IR length must not exceed the block size")

    # --- reshape audio into B-sample rows (free row-major reshape) -----------
    bpc = -(-T // block)                       # blocks (rows) per channel
    T_pad = bpc * block
    x = audio if T_pad == T else jnp.pad(audio, ((0, 0), (0, T_pad - T)))
    R0 = C * bpc
    x2d = x.reshape(R0, block)

    # --- tile picking: fixed/balanced tile, pad rows up to a tile multiple ---
    # (no more "tile must divide R" -> no degenerate 8-row tiles on odd T).
    if R0 <= max_tile_rows:
        tile_rows = _round_up(max(R0, 8), 8)
    else:
        nt = -(-R0 // max_tile_rows)
        tile_rows = _round_up(-(-R0 // nt), 8)   # balance tiles, minimize pad
    num_tiles = -(-R0 // tile_rows)
    R = num_tiles * tile_rows
    rows8 = tile_rows // 8

    if R > R0:
        x2d = jnp.pad(x2d, ((0, R - R0), (0, 0)))   # padded rows are discarded
    x2d_bf16 = x2d.astype(jnp.bfloat16)             # halves dominant DMA stream

    # --- stacked Toeplitz RHS (bf16, VMEM-resident: constant index map) ------
    M, H = _toeplitz_mats(ir_mixed.astype(jnp.float32), block)
    MH = jnp.concatenate([M, H], axis=0).astype(jnp.bfloat16)   # (2B, B)

    # --- per-row carry-in weights (precomputed; no in-kernel iota/compare) ---
    r = jnp.arange(R, dtype=jnp.int32)
    keep = (r % bpc != 0).astype(jnp.float32)          # 0 at each channel's t=0
    tile_first = (r % tile_rows == 0).astype(jnp.float32)
    w_halo = (keep * tile_first).reshape(R, 1)          # take halo row
    w_roll = (keep * (1.0 - tile_first)).reshape(R, 1)  # take in-tile rolled row

    bytes_accessed = (R * block * 2            # x (bf16)
                      + num_tiles * 8 * block * 2   # halo slabs (bf16)
                      + 2 * R * 4              # weight columns
                      + 2 * block * block * 2  # stacked M/H (bf16)
                      + R * block * 4)         # output (f32)

    y2d = pl.pallas_call(
        _reverb_fir_mxu_kernel,
        out_shape=jax.ShapeDtypeStruct((R, block), jnp.float32),
        grid=(num_tiles,),
        in_specs=[
            pl.BlockSpec((tile_rows, block), lambda i: (i, 0)),           # x tile
            pl.BlockSpec((8, block),
                         lambda i: (jnp.maximum(i * rows8 - 1, 0), 0)),   # halo
            pl.BlockSpec((tile_rows, 1), lambda i: (i, 0)),               # w_roll
            pl.BlockSpec((tile_rows, 1), lambda i: (i, 0)),               # w_halo
            pl.BlockSpec((2 * block, block), lambda i: (0, 0)),           # [M;H]
        ],
        out_specs=pl.BlockSpec((tile_rows, block), lambda i: (i, 0)),
        compiler_params=pltpu.CompilerParams(
            dimension_semantics=("parallel",)),
        cost_estimate=pl.CostEstimate(
            flops=4 * R * block * block,       # (tile_R,2B)@(2B,B) over all tiles
            transcendentals=0,
            bytes_accessed=bytes_accessed),
    )(x2d_bf16, x2d_bf16, w_roll, w_halo, MH)

    y = y2d[:R0].reshape(C, T_pad)
    return y if T_pad == T else y[:, :T]


# ------------------------------ Reverb module -------------------------------
class Reverb:
    """JAX/Pallas port of the PyTorch `Reverb` transform."""

    NUM_TAPS = 32  # FIR impulse-response length

    def __init__(self, sample_rate, reverberance_min=0, reverberance_max=100,
                 dumping_factor_min=0, dumping_factor_max=100,
                 room_size_min=0, room_size_max=40):
        self.sample_rate = sample_rate
        self.reverberance_min = reverberance_min
        self.reverberance_max = reverberance_max
        self.dumping_factor_min = dumping_factor_min
        self.dumping_factor_max = dumping_factor_max
        self.room_size_min = room_size_min
        self.room_size_max = room_size_max
        self.src_info = {'rate': self.sample_rate}
        self.target_info = {'channels': 1, 'rate': self.sample_rate}

    def _build_ir(self, reverberance, dumping_factor, room_size):
        L = self.NUM_TAPS
        wet = reverberance.astype(jnp.float32) / 100.0
        # room_size -> pre-delay (in taps), dumping_factor -> decay speed
        delay = jnp.floor(room_size.astype(jnp.float32) / 40.0 * (L // 4))
        k = jnp.arange(L, dtype=jnp.float32)
        decay = jnp.exp(-(0.5 + 4.0 * dumping_factor.astype(jnp.float32) / 100.0)
                        * k / jnp.float32(L))
        ir = jnp.where(k >= delay, decay, 0.0)
        ir = ir / jnp.maximum(jnp.sum(ir), 1e-6)
        return ir.astype(jnp.float32), wet

    def forward(self, au, key):
        audio, emotion = au['feature'], au['emotion']
        k1, k2, k3 = jax.random.split(key, 3)
        # NOTE: jax.random.randint upper bound is exclusive, matching
        # torch.randint(low, high) semantics in the original module.
        reverberance = jax.random.randint(
            k1, (), self.reverberance_min, self.reverberance_max)
        dumping_factor = jax.random.randint(
            k2, (), self.dumping_factor_min, self.dumping_factor_max)
        room_size = jax.random.randint(
            k3, (), self.room_size_min, self.room_size_max)

        ir, wet = self._build_ir(reverberance, dumping_factor, room_size)
        # Fold the wet/dry mix into the (already normalized) IR so the kernel
        # is a pure FIR: ir_mixed[0] carries the dry path.
        ir_mixed = wet * ir
        ir_mixed = ir_mixed.at[0].add(1.0 - wet)

        audio_out = reverb_apply(audio, ir_mixed)
        return {'feature': audio_out, 'emotion': emotion}

    __call__ = forward


# --------------------------------- main --------------------------------------
if __name__ == "__main__":
    key = jax.random.PRNGKey(0)
    k_audio, k_fwd = jax.random.split(key)

    C, T = 2, 5000  # (channels, samples); T not a block multiple -> pad path
    audio = jax.random.normal(k_audio, (C, T), dtype=jnp.float32)
    emotion = jnp.int32(3)
    au = {'feature': audio, 'emotion': emotion}

    module = Reverb(sample_rate=16000)
    out = module(au, k_fwd)
    out_feat = jax.block_until_ready(out['feature'])

    # Reference: plain-JAX causal FIR with wet/dry mix (pre-fold numerics).
    k1, k2, k3 = jax.random.split(k_fwd, 3)
    rev = jax.random.randint(k1, (), 0, 100)
    dump = jax.random.randint(k2, (), 0, 100)
    room = jax.random.randint(k3, (), 0, 40)
    ir, wet = module._build_ir(rev, dump, room)
    conv = jnp.stack(
        [jnp.convolve(audio[c], ir, mode='full')[:T] for c in range(C)])
    ref = (1.0 - wet) * audio + wet * conv

    assert out_feat.shape == (C, T) and out_feat.dtype == jnp.float32
    # Tolerances sized for bf16 MXU operands with f32 accumulation.
    rms_err = float(jnp.sqrt(jnp.mean((out_feat - ref) ** 2)))
    rms_ref = float(jnp.sqrt(jnp.mean(ref ** 2)))
    max_err = float(jnp.max(jnp.abs(out_feat - ref)))
    assert rms_err <= 2e-2 * rms_ref + 1e-3, (rms_err, rms_ref)
    assert max_err <= 1.5e-1, max_err
    assert out['emotion'] == emotion

    print("KERNEL_OK")
</pallas_src>

<mosaic_0001>
module attributes {stable_mosaic.version = 11 : i64} {
  func.func @_reverb_fir_mxu_kernel(%arg0: i32, %arg1: memref<40x256xbf16, #tpu.memory_space<vmem>>, %arg2: memref<8x256xbf16, #tpu.memory_space<vmem>>, %arg3: memref<40x1xf32, #tpu.memory_space<vmem>>, %arg4: memref<40x1xf32, #tpu.memory_space<vmem>>, %arg5: memref<512x256xbf16, #tpu.memory_space<vmem>>, %arg6: memref<40x256xf32, #tpu.memory_space<vmem>>) attributes {dimension_semantics = [#tpu.dimension_semantics<parallel>], iteration_bounds = array<i64: 1>, scalar_prefetch = 0 : i64, scratch_operands = 0 : i64, tpu.core_type = #tpu.core_type<tc>, window_params = [{transform_indices = @transform_0, window_bounds = array<i64: 40, 256>}, {transform_indices = @transform_1, window_bounds = array<i64: 8, 256>}, {transform_indices = @transform_2, window_bounds = array<i64: 40, 1>}, {transform_indices = @transform_3, window_bounds = array<i64: 40, 1>}, {pipeline_mode = #tpu.pipeline_mode<synchronous>, transform_indices = @transform_4, window_bounds = array<i64: 512, 256>}, {transform_indices = @transform_5, window_bounds = array<i64: 40, 256>}]} {
    %c0 = arith.constant 0 : index
    %c0_0 = arith.constant 0 : index
    %0 = vector.load %arg1[%c0, %c0_0] : memref<40x256xbf16, #tpu.memory_space<vmem>>, vector<40x256xbf16>
    %1 = arith.extf %0 : vector<40x256xbf16> to vector<40x256xf32>
    %c1_i32 = arith.constant 1 : i32
    %2 = tpu.dynamic_rotate %1 by %c1_i32 dim 0 : vector<40x256xf32>, i32 -> vector<40x256xf32>
    %c0_1 = arith.constant 0 : index
    %c0_2 = arith.constant 0 : index
    %3 = vector.load %arg3[%c0_1, %c0_2] : memref<40x1xf32, #tpu.memory_space<vmem>>, vector<40x1xf32>
    %4 = vector.broadcast %3 : vector<40x1xf32> to vector<40x256xf32>
    %5 = arith.mulf %2, %4 : vector<40x256xf32>
    %c7 = arith.constant 7 : index
    %c0_3 = arith.constant 0 : index
    %6 = vector.load %arg2[%c7, %c0_3] : memref<8x256xbf16, #tpu.memory_space<vmem>>, vector<1x256xbf16>
    %7 = arith.extf %6 : vector<1x256xbf16> to vector<1x256xf32>
    %c0_4 = arith.constant 0 : index
    %c0_5 = arith.constant 0 : index
    %8 = vector.load %arg4[%c0_4, %c0_5] : memref<40x1xf32, #tpu.memory_space<vmem>>, vector<40x1xf32>
    %9 = vector.broadcast %7 : vector<1x256xf32> to vector<40x256xf32>
    %10 = vector.broadcast %8 : vector<40x1xf32> to vector<40x256xf32>
    %11 = arith.mulf %9, %10 : vector<40x256xf32>
    %12 = arith.addf %5, %11 : vector<40x256xf32>
    %13 = arith.truncf %12 : vector<40x256xf32> to vector<40x256xbf16>
    %14 = tpu.concatenate %0, %13 in 1 : vector<40x256xbf16>, vector<40x256xbf16> -> vector<40x512xbf16>
    %c0_6 = arith.constant 0 : index
    %c0_7 = arith.constant 0 : index
    %15 = vector.load %arg5[%c0_6, %c0_7] : memref<512x256xbf16, #tpu.memory_space<vmem>>, vector<512x256xbf16>
    %cst = arith.constant dense<0.000000e+00> : vector<40x256xf32>
    %16 = tpu.matmul %14, %15, %cst {dimension_numbers = #tpu.dot_dimension_numbers<[1], [0], [0], [1], [0, 0, 1, 1], [], []>} : vector<40x512xbf16>, vector<512x256xbf16>, vector<40x256xf32> -> vector<40x256xf32>
    %c0_8 = arith.constant 0 : index
    %c0_9 = arith.constant 0 : index
    %17 = vector.load %arg6[%c0_8, %c0_9] : memref<40x256xf32, #tpu.memory_space<vmem>>, vector<40x256xf32>
    tpu.vector_store %arg6[%c0_8, %c0_9], %16 {strides = array<i32>} : memref<40x256xf32, #tpu.memory_space<vmem>>, vector<40x256xf32>,
    return
  }
  func.func @transform_0(%arg0: i32) -> (i32, i32) {
    %c0_i32 = arith.constant 0 : i32
    %c0_i32_0 = arith.constant 0 : i32
    return %arg0, %c0_i32 : i32, i32
  }
  func.func @transform_1(%arg0: i32) -> (i32, i32) {
    %c5_i32 = arith.constant 5 : i32
    %0 = arith.muli %arg0, %c5_i32 : i32
    %c1_i32 = arith.constant 1 : i32
    %1 = arith.subi %0, %c1_i32 : i32
    %c0_i32 = arith.constant 0 : i32
    %2 = arith.maxsi %1, %c0_i32 : i32
    %c0_i32_0 = arith.constant 0 : i32
    %c0_i32_1 = arith.constant 0 : i32
    return %2, %c0_i32_0 : i32, i32
  }
  func.func @transform_2(%arg0: i32) -> (i32, i32) {
    %c0_i32 = arith.constant 0 : i32
    %c0_i32_0 = arith.constant 0 : i32
    return %arg0, %c0_i32 : i32, i32
  }
  func.func @transform_3(%arg0: i32) -> (i32, i32) {
    %c0_i32 = arith.constant 0 : i32
    %c0_i32_0 = arith.constant 0 : i32
    return %arg0, %c0_i32 : i32, i32
  }
  func.func @transform_4(%arg0: i32) -> (i32, i32) {
    %c0_i32 = arith.constant 0 : i32
    %c0_i32_0 = arith.constant 0 : i32
    %c0_i32_1 = arith.constant 0 : i32
    return %c0_i32, %c0_i32_0 : i32, i32
  }
  func.func @transform_5(%arg0: i32) -> (i32, i32) {
    %c0_i32 = arith.constant 0 : i32
    %c0_i32_0 = arith.constant 0 : i32
    return %arg0, %c0_i32 : i32, i32
  }
}

</mosaic_0001>

<llo_original>
// kernel: tpu_custom_call.1
$region0: #{tpu_custom_call.1}
  #allocation0 [shape = 'u32[]', space=smem, size = 0x4, offset = 0x4, fixed_abs, tag = 'smem constant byte address 0x4 - core index']
  #allocation1 [shape = 'u32[144,128]{1,0:T(1,128)}', space=vmem, size = 0x12000, scoped, tag = 'internal scratch']
  %s0 = inlined_call_operand.vmem [shape: bf16[40,256], index: 0, kind: input, shape index: {}]
  %s1 = inlined_call_operand.vmem [shape: bf16[40,256], index: 1, kind: input, shape index: {}]
  %s2 = inlined_call_operand.vmem [shape: f32[40,1], index: 2, kind: input, shape index: {}]
  %s3 = inlined_call_operand.vmem [shape: f32[40,1], index: 3, kind: input, shape index: {}]
  %s4 = inlined_call_operand.hbm [shape: bf16[512,256], index: 4, kind: input, shape index: {}]
  %s5 = inlined_call_operand.hbm [shape: f32[40,256], index: 5, kind: output, shape index: {}]
  %s6 = sld [smem:[#allocation0]]
  $region34: #{tpu_custom_call.1} parent=0
    _
  %s8 = ssub.s32 1, %s6
  %s9 = scalar_select 0, %s8, %s6
  $region1: #{tpu_custom_call.1} parent=0
    #allocation2 [shape = 'u8[262144]{0}', space=vmem, size = 0x40000, scoped, tag = 'input window, operand 4, single buffered']
    #allocation3 [shape = 's32[1]{0}', space=sflag, size = 0x4, scoped, tag = 'scoped memory for tpu_custom_call.1']
    #allocation4 [shape = 's32[1]{0}', space=sflag, size = 0x4, scoped, tag = 'scoped memory for tpu_custom_call.1']
    #allocation5 [shape = 'u8[40960]{0}', space=vmem, size = 0xa000, scoped, tag = 'output window, operand 0, single buffered']
    %10 = vsyncpa [#allocation3], 0
    %11 = vsyncpa [#allocation4], 0
    // Predicated region
    $region2: #{tpu_custom_call.1} parent=1 // pred_check
      _
    $region3: #{tpu_custom_call.1} parent=1 // pred_check_branch
      %13 = sbr.rel (0) target = $region5
    $region4: #{tpu_custom_call.1} parent=1 // pred_region
      _
    $region5: #{tpu_custom_call.1} parent=1 // pred_fallthru
      _
    // Predicated region
    $region6: #{tpu_custom_call.1} parent=1 // pred_check
      _
    $region7: #{tpu_custom_call.1} parent=1 // pred_check_branch
      %15 = sbr.rel (0) target = $region9
    $region8: #{tpu_custom_call.1} parent=1 // pred_region
      %s16 = smul.u32 0, 5
      %s17 = ssub.s32 %s16, 1
      %p18 = scmp.gt.s32.totalorder %s17, 0
      %s19 = scalar_select %p18, %s17, 0
      %p20 = scmp.lt.s32.totalorder %s19, 4
      %s21 = scalar_select %p20, %s19, 4
      %s22 = smul.addr %s21, 2
      %s23 = smul.addr %s22, 4
      %s24 = scalar_lea.vmem %s1, %s23
      %s25 = smul.u32 0, 5
      %s26 = ssub.s32 %s25, 1
      %p27 = scmp.gt.s32.totalorder %s26, 0
      %s28 = scalar_select %p27, %s26, 0
    $region9: #{tpu_custom_call.1} parent=1 // pred_fallthru
      _
    // Predicated region
    $region10: #{tpu_custom_call.1} parent=1 // pred_check
      _
    $region11: #{tpu_custom_call.1} parent=1 // pred_check_branch
      %30 = sbr.rel (0) target = $region13
    $region12: #{tpu_custom_call.1} parent=1 // pred_region
      _
    $region13: #{tpu_custom_call.1} parent=1 // pred_fallthru
      _
    // Predicated region
    $region14: #{tpu_custom_call.1} parent=1 // pred_check
      _
    $region15: #{tpu_custom_call.1} parent=1 // pred_check_branch
      %32 = sbr.rel (0) target = $region17
    $region16: #{tpu_custom_call.1} parent=1 // pred_region
      _
    $region17: #{tpu_custom_call.1} parent=1 // pred_fallthru
      _
    // Predicated region
    $region18: #{tpu_custom_call.1} parent=1 // pred_check
      _
    $region19: #{tpu_custom_call.1} parent=1 // pred_check_branch
      %34 = sbr.rel (0) target = $region21
    $region20: #{tpu_custom_call.1} parent=1 // pred_region
      %s36 = ssub.s32 8192, 8192
      %37 = vsyncadd [#allocation3], %s36
      %s38 = sshll.u32 [#allocation2], 4
      %s39 = int_to_ptr.vmem [resolvable:$true] %s38
      %44 = dma.hbm_to_vmem [thread:$0]  %s4, 8192, %s39, [#allocation3], 128, 128, 8
    $region21: #{tpu_custom_call.1} parent=1 // pred_fallthru
      _
    // Predicated region
    $region22: #{tpu_custom_call.1} parent=1 // pred_check
      _
    $region23: #{tpu_custom_call.1} parent=1 // pred_check_branch
      %46 = sbr.rel (0) target = $region25
    $region24: #{tpu_custom_call.1} parent=1 // pred_region
      %47 = dma.done [#allocation3], 8192
    $region25: #{tpu_custom_call.1} parent=1 // pred_fallthru
      _
    %s48 = smul.u32 0, 5
    %s49 = ssub.s32 %s48, 1
    %p50 = scmp.gt.s32.totalorder %s49, 0
    %s51 = scalar_select %p50, %s49, 0
    %p52 = scmp.lt.s32.totalorder %s51, 4
    %s53 = scalar_select %p52, %s51, 4
    %s54 = smul.addr %s53, 2
    %s55 = smul.addr %s54, 4
    %s56 = scalar_lea.vmem %s1, %s55
    %s57 = smul.u32 0, 5
    %s58 = ssub.s32 %s57, 1
    %p59 = scmp.gt.s32.totalorder %s58, 0
    %s60 = scalar_select %p59, %s58, 0
    %p61 = scmp.lt.s32.totalorder %s60, 4
    %s62 = scalar_select %p61, %s60, 4
    %s63 = smul.addr %s62, 2
    %s64 = smul.addr %s63, 4
    %s65 = scalar_lea.vmem %s1, %s64
    %s66 = smul.u32 0, 5
    %s67 = ssub.s32 %s66, 1
    %p68 = scmp.gt.s32.totalorder %s67, 0
    %s69 = scalar_select %p68, %s67, 0
    %v70 = vld [vmem:[%s0] sm:$0xff]
    %v71 = vld [vmem:[%s0 + $0x8] sm:$0xff]
    %v72 = vld [vmem:[%s0 + $0x10] sm:$0xff]
    %v73 = vld [vmem:[%s0 + $0x18] sm:$0xff]
    %v74 = vld [vmem:[%s0 + $0x20] sm:$0xff]
    %v75 = vunpack.c.l.bf16 %v70
    %v76 = vunpack.c.h.bf16 %v70
    %v77 = vunpack.c.l.bf16 %v71
    %v78 = vunpack.c.h.bf16 %v71
    %v79 = vunpack.c.l.bf16 %v72
    %v80 = vunpack.c.h.bf16 %v72
    %v81 = vunpack.c.l.bf16 %v73
    %v82 = vunpack.c.h.bf16 %v73
    %v83 = vunpack.c.l.bf16 %v74
    %v84 = vunpack.c.h.bf16 %v74
    %v85 = vrot.slane %v75, 7
    %v86 = vrot.slane %v76, 7
    %v87 = vrot.slane %v77, 7
    %v88 = vrot.slane %v78, 7
    %v89 = vrot.slane %v79, 7
    %v90 = vrot.slane %v80, 7
    %v91 = vrot.slane %v81, 7
    %v92 = vrot.slane %v82, 7
    %v93 = vrot.slane %v83, 7
    %v94 = vrot.slane %v84, 7
    %v95 = vlaneseq
    %v96 = vshrl.u32 %v95, 7
    %vm97 = vcmp.lt.s32.totalorder %v96, 1
    %v98 = vsel %vm97, %v91, %v93
    %v99 = vsel %vm97, %v92, %v94
    %v100 = vsel %vm97, %v89, %v91
    %v101 = vsel %vm97, %v90, %v92
    %v102 = vsel %vm97, %v87, %v89
    %v103 = vsel %vm97, %v88, %v90
    %v104 = vsel %vm97, %v85, %v87
    %v105 = vsel %vm97, %v86, %v88
    %v106 = vsel %vm97, %v93, %v85
    %v107 = vsel %vm97, %v94, %v86
    %v108 = vld [vmem:[%s2] sm:$0xff]
    %v109 = vld [vmem:[%s2 + $0x8] sm:$0xff]
    %v110 = vld [vmem:[%s2 + $0x10] sm:$0xff]
    %v111 = vld [vmem:[%s2 + $0x18] sm:$0xff]
    %v112 = vld [vmem:[%s2 + $0x20] sm:$0xff]
    %114 = vset.pattern.permute.xlu0 0
    %115 = vperm.xlu0 %114, %v108
    %v116 = vpop.permute.xlu0 %115
    %119 = vset.pattern.permute.xlu0 0
    %120 = vperm.xlu0 %119, %v109
    %v121 = vpop.permute.xlu0 %120
    %124 = vset.pattern.permute.xlu0 0
    %125 = vperm.xlu0 %124, %v110
    %v126 = vpop.permute.xlu0 %125
    %129 = vset.pattern.permute.xlu0 0
    %130 = vperm.xlu0 %129, %v111
    %v131 = vpop.permute.xlu0 %130
    %134 = vset.pattern.permute.xlu0 0
    %135 = vperm.xlu0 %134, %v112
    %v136 = vpop.permute.xlu0 %135
    %v138 = vmul.f32 %v106, %v116
    %v139 = vmul.f32 %v107, %v116
    %v140 = vmul.f32 %v104, %v121
    %v141 = vmul.f32 %v105, %v121
    %v142 = vmul.f32 %v102, %v126
    %v143 = vmul.f32 %v103, %v126
    %v144 = vmul.f32 %v100, %v131
    %v145 = vmul.f32 %v101, %v131
    %v146 = vmul.f32 %v98, %v136
    %v147 = vmul.f32 %v99, %v136
    %v148 = vld [vmem:[%s65] sm:$0x88]
    %v149 = vunpack.c.l.bf16 %v148
    %v150 = vunpack.c.h.bf16 %v148
    %v151 = vld [vmem:[%s3] sm:$0xff]
    %v152 = vld [vmem:[%s3 + $0x8] sm:$0xff]
    %v153 = vld [vmem:[%s3 + $0x10] sm:$0xff]
    %v154 = vld [vmem:[%s3 + $0x18] sm:$0xff]
    %v155 = vld [vmem:[%s3 + $0x20] sm:$0xff]
    %v156 = vlaneseq
    %v157 = vshrl.u32 %v156, 7
    %v158 = vsub.s32 7, %v157
    %v159 = vrot.slane %v149, %v158
    %v160 = vlaneseq
    %v161 = vshrl.u32 %v160, 7
    %v162 = vsub.s32 7, %v161
    %v163 = vrot.slane %v150, %v162
    %165 = vset.pattern.permute.xlu0 0
    %166 = vperm.xlu0 %165, %v151
    %v167 = vpop.permute.xlu0 %166
    %170 = vset.pattern.permute.xlu0 0
    %171 = vperm.xlu0 %170, %v152
    %v172 = vpop.permute.xlu0 %171
    %175 = vset.pattern.permute.xlu0 0
    %176 = vperm.xlu0 %175, %v153
    %v177 = vpop.permute.xlu0 %176
    %180 = vset.pattern.permute.xlu0 0
    %181 = vperm.xlu0 %180, %v154
    %v182 = vpop.permute.xlu0 %181
    %185 = vset.pattern.permute.xlu0 0
    %186 = vperm.xlu0 %185, %v155
    %v187 = vpop.permute.xlu0 %186
    %v189 = vmul.f32 %v159, %v167
    %v190 = vmul.f32 %v163, %v167
    %v191 = vmul.f32 %v159, %v172
    %v192 = vmul.f32 %v163, %v172
    %v193 = vmul.f32 %v159, %v177
    %v194 = vmul.f32 %v163, %v177
    %v195 = vmul.f32 %v159, %v182
    %v196 = vmul.f32 %v163, %v182
    %v197 = vmul.f32 %v159, %v187
    %v198 = vmul.f32 %v163, %v187
    %v199 = vadd.f32 %v138, %v189
    %v200 = vadd.f32 %v139, %v190
    %v201 = vadd.f32 %v140, %v191
    %v202 = vadd.f32 %v141, %v192
    %v203 = vadd.f32 %v142, %v193
    %v204 = vadd.f32 %v143, %v194
    %v205 = vadd.f32 %v144, %v195
    %v206 = vadd.f32 %v145, %v196
    %v207 = vadd.f32 %v146, %v197
    %v208 = vadd.f32 %v147, %v198
    %v209 = vpack.c.bf16 %v201, %v199
    %v210 = vpack.c.bf16 %v202, %v200
    %v211 = vpack.c.bf16 %v205, %v203
    %v212 = vpack.c.bf16 %v206, %v204
    %v213 = vpack.c.bf16 %v207, %v207
    %v214 = vpack.c.bf16 %v208, %v208
    %v220 = vunpack.c.l.b16 %v70
    %v221 = vunpack.c.h.b16 %v70
    %v222 = vunpack.c.l.b16 %v71
    %v223 = vunpack.c.h.b16 %v71
    %v224 = vunpack.c.l.b16 %v72
    %v225 = vunpack.c.h.b16 %v72
    %v226 = vunpack.c.l.b16 %v73
    %v227 = vunpack.c.h.b16 %v73
    %v228 = vunpack.c.l.b16 %v74
    %v229 = vunpack.c.h.b16 %v74
    %v230 = vpack.c.b16 %v222, %v220
    %v231 = vpack.c.b16 %v223, %v221
    %v232 = vpack.c.b16 %v226, %v224
    %v233 = vpack.c.b16 %v227, %v225
    %v234 = vpack.c.b16 %v228, %v228
    %v235 = vpack.c.b16 %v229, %v229
    %v242 = vld [vmem:[#allocation2] sm:$0xff]
    %v243 = vld [vmem:[#allocation2 + $0x8] sm:$0xff]
    %v244 = vld [vmem:[#allocation2 + $0x10] sm:$0xff]
    %v245 = vld [vmem:[#allocation2 + $0x18] sm:$0xff]
    %v246 = vld [vmem:[#allocation2 + $0x20] sm:$0xff]
    %v247 = vld [vmem:[#allocation2 + $0x28] sm:$0xff]
    %v248 = vld [vmem:[#allocation2 + $0x30] sm:$0xff]
    %v249 = vld [vmem:[#allocation2 + $0x38] sm:$0xff]
    %v250 = vld [vmem:[#allocation2 + $0x40] sm:$0xff]
    %v251 = vld [vmem:[#allocation2 + $0x48] sm:$0xff]
    %v252 = vld [vmem:[#allocation2 + $0x50] sm:$0xff]
    %v253 = vld [vmem:[#allocation2 + $0x58] sm:$0xff]
    %v254 = vld [vmem:[#allocation2 + $0x60] sm:$0xff]
    %v255 = vld [vmem:[#allocation2 + $0x68] sm:$0xff]
    %v256 = vld [vmem:[#allocation2 + $0x70] sm:$0xff]
    %v257 = vld [vmem:[#allocation2 + $0x78] sm:$0xff]
    %v258 = vld [vmem:[#allocation2 + $0x80] sm:$0xff]
    %v259 = vld [vmem:[#allocation2 + $0x88] sm:$0xff]
    %v260 = vld [vmem:[#allocation2 + $0x90] sm:$0xff]
    %v261 = vld [vmem:[#allocation2 + $0x98] sm:$0xff]
    %v262 = vld [vmem:[#allocation2 + $0xa0] sm:$0xff]
    %v263 = vld [vmem:[#allocation2 + $0xa8] sm:$0xff]
    %v264 = vld [vmem:[#allocation2 + $0xb0] sm:$0xff]
    %v265 = vld [vmem:[#allocation2 + $0xb8] sm:$0xff]
    %v266 = vld [vmem:[#allocation2 + $0xc0] sm:$0xff]
    %v267 = vld [vmem:[#allocation2 + $0xc8] sm:$0xff]
    %v268 = vld [vmem:[#allocation2 + $0xd0] sm:$0xff]
    %v269 = vld [vmem:[#allocation2 + $0xd8] sm:$0xff]
    %v270 = vld [vmem:[#allocation2 + $0xe0] sm:$0xff]
    %v271 = vld [vmem:[#allocation2 + $0xe8] sm:$0xff]
    %v272 = vld [vmem:[#allocation2 + $0xf0] sm:$0xff]
    %v273 = vld [vmem:[#allocation2 + $0xf8] sm:$0xff]
    %v274 = vld [vmem:[#allocation2 + $0x100] sm:$0xff]
    %v275 = vld [vmem:[#allocation2 + $0x108] sm:$0xff]
    %v276 = vld [vmem:[#allocation2 + $0x110] sm:$0xff]
    %v277 = vld [vmem:[#allocation2 + $0x118] sm:$0xff]
    %v278 = vld [vmem:[#allocation2 + $0x120] sm:$0xff]
    %v279 = vld [vmem:[#allocation2 + $0x128] sm:$0xff]
    %v280 = vld [vmem:[#allocation2 + $0x130] sm:$0xff]
    %v281 = vld [vmem:[#allocation2 + $0x138] sm:$0xff]
    %v282 = vld [vmem:[#allocation2 + $0x140] sm:$0xff]
    %v283 = vld [vmem:[#allocation2 + $0x148] sm:$0xff]
    %v284 = vld [vmem:[#allocation2 + $0x150] sm:$0xff]
    %v285 = vld [vmem:[#allocation2 + $0x158] sm:$0xff]
    %v286 = vld [vmem:[#allocation2 + $0x160] sm:$0xff]
    %v287 = vld [vmem:[#allocation2 + $0x168] sm:$0xff]
    %v288 = vld [vmem:[#allocation2 + $0x170] sm:$0xff]
    %v289 = vld [vmem:[#allocation2 + $0x178] sm:$0xff]
    %v290 = vld [vmem:[#allocation2 + $0x180] sm:$0xff]
    %v291 = vld [vmem:[#allocation2 + $0x188] sm:$0xff]
    %v292 = vld [vmem:[#allocation2 + $0x190] sm:$0xff]
    %v293 = vld [vmem:[#allocation2 + $0x198] sm:$0xff]
    %v294 = vld [vmem:[#allocation2 + $0x1a0] sm:$0xff]
    %v295 = vld [vmem:[#allocation2 + $0x1a8] sm:$0xff]
    %v296 = vld [vmem:[#allocation2 + $0x1b0] sm:$0xff]
    %v297 = vld [vmem:[#allocation2 + $0x1b8] sm:$0xff]
    %v298 = vld [vmem:[#allocation2 + $0x1c0] sm:$0xff]
    %v299 = vld [vmem:[#allocation2 + $0x1c8] sm:$0xff]
    %v300 = vld [vmem:[#allocation2 + $0x1d0] sm:$0xff]
    %v301 = vld [vmem:[#allocation2 + $0x1d8] sm:$0xff]
    %v302 = vld [vmem:[#allocation2 + $0x1e0] sm:$0xff]
    %v303 = vld [vmem:[#allocation2 + $0x1e8] sm:$0xff]
    %v304 = vld [vmem:[#allocation2 + $0x1f0] sm:$0xff]
    %v305 = vld [vmem:[#allocation2 + $0x1f8] sm:$0xff]
    %v370 = vunpack.c.l.b16 %v242
    %v371 = vunpack.c.h.b16 %v242
    %v372 = vunpack.c.l.b16 %v243
    %v373 = vunpack.c.h.b16 %v243
    %v374 = vunpack.c.l.b16 %v244
    %v375 = vunpack.c.h.b16 %v244
    %v376 = vunpack.c.l.b16 %v245
    %v377 = vunpack.c.h.b16 %v245
    %v378 = vunpack.c.l.b16 %v246
    %v379 = vunpack.c.h.b16 %v246
    %v380 = vunpack.c.l.b16 %v247
    %v381 = vunpack.c.h.b16 %v247
    %v382 = vunpack.c.l.b16 %v248
    %v383 = vunpack.c.h.b16 %v248
    %v384 = vunpack.c.l.b16 %v249
    %v385 = vunpack.c.h.b16 %v249
    %v386 = vunpack.c.l.b16 %v250
    %v387 = vunpack.c.h.b16 %v250
    %v388 = vunpack.c.l.b16 %v251
    %v389 = vunpack.c.h.b16 %v251
    %v390 = vunpack.c.l.b16 %v252
    %v391 = vunpack.c.h.b16 %v252
    %v392 = vunpack.c.l.b16 %v253
    %v393 = vunpack.c.h.b16 %v253
    %v394 = vunpack.c.l.b16 %v254
    %v395 = vunpack.c.h.b16 %v254
    %v396 = vunpack.c.l.b16 %v255
    %v397 = vunpack.c.h.b16 %v255
    %v398 = vunpack.c.l.b16 %v256
    %v399 = vunpack.c.h.b16 %v256
    %v400 = vunpack.c.l.b16 %v257
    %v401 = vunpack.c.h.b16 %v257
    %v402 = vunpack.c.l.b16 %v258
    %v403 = vunpack.c.h.b16 %v258
    %v404 = vunpack.c.l.b16 %v259
    %v405 = vunpack.c.h.b16 %v259
    %v406 = vunpack.c.l.b16 %v260
    %v407 = vunpack.c.h.b16 %v260
    %v408 = vunpack.c.l.b16 %v261
    %v409 = vunpack.c.h.b16 %v261
    %v410 = vunpack.c.l.b16 %v262
    %v411 = vunpack.c.h.b16 %v262
    %v412 = vunpack.c.l.b16 %v263
    %v413 = vunpack.c.h.b16 %v263
    %v414 = vunpack.c.l.b16 %v264
    %v415 = vunpack.c.h.b16 %v264
    %v416 = vunpack.c.l.b16 %v265
    %v417 = vunpack.c.h.b16 %v265
    %v418 = vunpack.c.l.b16 %v266
    %v419 = vunpack.c.h.b16 %v266
    %v420 = vunpack.c.l.b16 %v267
    %v421 = vunpack.c.h.b16 %v267
    %v422 = vunpack.c.l.b16 %v268
    %v423 = vunpack.c.h.b16 %v268
    %v424 = vunpack.c.l.b16 %v269
    %v425 = vunpack.c.h.b16 %v269
    %v426 = vunpack.c.l.b16 %v270
    %v427 = vunpack.c.h.b16 %v270
    %v428 = vunpack.c.l.b16 %v271
    %v429 = vunpack.c.h.b16 %v271
    %v430 = vunpack.c.l.b16 %v272
    %v431 = vunpack.c.h.b16 %v272
    %v432 = vunpack.c.l.b16 %v273
    %v433 = vunpack.c.h.b16 %v273
    %v434 = vunpack.c.l.b16 %v274
    %v435 = vunpack.c.h.b16 %v274
    %v436 = vunpack.c.l.b16 %v275
    %v437 = vunpack.c.h.b16 %v275
    %v438 = vunpack.c.l.b16 %v276
    %v439 = vunpack.c.h.b16 %v276
    %v440 = vunpack.c.l.b16 %v277
    %v441 = vunpack.c.h.b16 %v277
    %v442 = vunpack.c.l.b16 %v278
    %v443 = vunpack.c.h.b16 %v278
    %v444 = vunpack.c.l.b16 %v279
    %v445 = vunpack.c.h.b16 %v279
    %v446 = vunpack.c.l.b16 %v280
    %v447 = vunpack.c.h.b16 %v280
    %v448 = vunpack.c.l.b16 %v281
    %v449 = vunpack.c.h.b16 %v281
    %v450 = vunpack.c.l.b16 %v282
    %v451 = vunpack.c.h.b16 %v282
    %v452 = vunpack.c.l.b16 %v283
    %v453 = vunpack.c.h.b16 %v283
    %v454 = vunpack.c.l.b16 %v284
    %v455 = vunpack.c.h.b16 %v284
    %v456 = vunpack.c.l.b16 %v285
    %v457 = vunpack.c.h.b16 %v285
    %v458 = vunpack.c.l.b16 %v286
    %v459 = vunpack.c.h.b16 %v286
    %v460 = vunpack.c.l.b16 %v287
    %v461 = vunpack.c.h.b16 %v287
    %v462 = vunpack.c.l.b16 %v288
    %v463 = vunpack.c.h.b16 %v288
    %v464 = vunpack.c.l.b16 %v289
    %v465 = vunpack.c.h.b16 %v289
    %v466 = vunpack.c.l.b16 %v290
    %v467 = vunpack.c.h.b16 %v290
    %v468 = vunpack.c.l.b16 %v291
    %v469 = vunpack.c.h.b16 %v291
    %v470 = vunpack.c.l.b16 %v292
    %v471 = vunpack.c.h.b16 %v292
    %v472 = vunpack.c.l.b16 %v293
    %v473 = vunpack.c.h.b16 %v293
    %v474 = vunpack.c.l.b16 %v294
    %v475 = vunpack.c.h.b16 %v294
    %v476 = vunpack.c.l.b16 %v295
    %v477 = vunpack.c.h.b16 %v295
    %v478 = vunpack.c.l.b16 %v296
    %v479 = vunpack.c.h.b16 %v296
    %v480 = vunpack.c.l.b16 %v297
    %v481 = vunpack.c.h.b16 %v297
    %v482 = vunpack.c.l.b16 %v298
    %v483 = vunpack.c.h.b16 %v298
    %v484 = vunpack.c.l.b16 %v299
    %v485 = vunpack.c.h.b16 %v299
    %v486 = vunpack.c.l.b16 %v300
    %v487 = vunpack.c.h.b16 %v300
    %v488 = vunpack.c.l.b16 %v301
    %v489 = vunpack.c.h.b16 %v301
    %v490 = vunpack.c.l.b16 %v302
    %v491 = vunpack.c.h.b16 %v302
    %v492 = vunpack.c.l.b16 %v303
    %v493 = vunpack.c.h.b16 %v303
    %v494 = vunpack.c.l.b16 %v304
    %v495 = vunpack.c.h.b16 %v304
    %v496 = vunpack.c.l.b16 %v305
    %v497 = vunpack.c.h.b16 %v305
    %v498 = vpack.c.b16 %v372, %v370
    %v499 = vpack.c.b16 %v373, %v371
    %v500 = vpack.c.b16 %v376, %v374
    %v501 = vpack.c.b16 %v377, %v375
    %v502 = vpack.c.b16 %v380, %v378
    %v503 = vpack.c.b16 %v381, %v379
    %v504 = vpack.c.b16 %v384, %v382
    %v505 = vpack.c.b16 %v385, %v383
    %v506 = vpack.c.b16 %v388, %v386
    %v507 = vpack.c.b16 %v389, %v387
    %v508 = vpack.c.b16 %v392, %v390
    %v509 = vpack.c.b16 %v393, %v391
    %v510 = vpack.c.b16 %v396, %v394
    %v511 = vpack.c.b16 %v397, %v395
    %v512 = vpack.c.b16 %v400, %v398
    %v513 = vpack.c.b16 %v401, %v399
    %v514 = vpack.c.b16 %v404, %v402
    %v515 = vpack.c.b16 %v405, %v403
    %v516 = vpack.c.b16 %v408, %v406
    %v517 = vpack.c.b16 %v409, %v407
    %v518 = vpack.c.b16 %v412, %v410
    %v519 = vpack.c.b16 %v413, %v411
    %v520 = vpack.c.b16 %v416, %v414
    %v521 = vpack.c.b16 %v417, %v415
    %v522 = vpack.c.b16 %v420, %v418
    %v523 = vpack.c.b16 %v421, %v419
    %v524 = vpack.c.b16 %v424, %v422
    %v525 = vpack.c.b16 %v425, %v423
    %v526 = vpack.c.b16 %v428, %v426
    %v527 = vpack.c.b16 %v429, %v427
    %v528 = vpack.c.b16 %v432, %v430
    %v529 = vpack.c.b16 %v433, %v431
    %v530 = vpack.c.b16 %v436, %v434
    %v531 = vpack.c.b16 %v437, %v435
    %v532 = vpack.c.b16 %v440, %v438
    %v533 = vpack.c.b16 %v441, %v439
    %v534 = vpack.c.b16 %v444, %v442
    %v535 = vpack.c.b16 %v445, %v443
    %v536 = vpack.c.b16 %v448, %v446
    %v537 = vpack.c.b16 %v449, %v447
    %v538 = vpack.c.b16 %v452, %v450
    %v539 = vpack.c.b16 %v453, %v451
    %v540 = vpack.c.b16 %v456, %v454
    %v541 = vpack.c.b16 %v457, %v455
    %v542 = vpack.c.b16 %v460, %v458
    %v543 = vpack.c.b16 %v461, %v459
    %v544 = vpack.c.b16 %v464, %v462
    %v545 = vpack.c.b16 %v465, %v463
    %v546 = vpack.c.b16 %v468, %v466
    %v547 = vpack.c.b16 %v469, %v467
    %v548 = vpack.c.b16 %v472, %v470
    %v549 = vpack.c.b16 %v473, %v471
    %v550 = vpack.c.b16 %v476, %v474
    %v551 = vpack.c.b16 %v477, %v475
    %v552 = vpack.c.b16 %v480, %v478
    %v553 = vpack.c.b16 %v481, %v479
    %v554 = vpack.c.b16 %v484, %v482
    %v555 = vpack.c.b16 %v485, %v483
    %v556 = vpack.c.b16 %v488, %v486
    %v557 = vpack.c.b16 %v489, %v487
    %v558 = vpack.c.b16 %v492, %v490
    %v559 = vpack.c.b16 %v493, %v491
    %v560 = vpack.c.b16 %v496, %v494
    %v561 = vpack.c.b16 %v497, %v495
    %626 = vmatprep.subr.bf16.mxu0 %v499
    %627 = vmatpush1.bf16.msra.mxu0 %v498
    %628 = vmatprep.subr.bf16.mxu0 %v501
    %629 = vmatpush1.bf16.msra.mxu0 %v500
    %630 = vmatprep.subr.bf16.mxu0 %v503
    %631 = vmatpush1.bf16.msra.mxu0 %v502
    %632 = vmatprep.subr.bf16.mxu0 %v505
    %633 = vmatpush1.bf16.msra.mxu0 %v504
    %634 = vmatprep.subr.bf16.mxu0 %v507
    %635 = vmatpush1.bf16.msra.mxu0 %v506
    %636 = vmatprep.subr.bf16.mxu0 %v509
    %637 = vmatpush1.bf16.msra.mxu0 %v508
    %638 = vmatprep.subr.bf16.mxu0 %v511
    %639 = vmatpush1.bf16.msra.mxu0 %v510
    %640 = vmatprep.subr.bf16.mxu0 %v513
    %641 = vmatpush1.bf16.msra.mxu0 %v512
    %642 = vmatprep.subr.bf16.mxu0 %v515
    %643 = vmatpush1.bf16.msra.mxu0 %v514
    %644 = vmatprep.subr.bf16.mxu0 %v517
    %645 = vmatpush1.bf16.msra.mxu0 %v516
    %646 = vmatprep.subr.bf16.mxu0 %v519
    %647 = vmatpush1.bf16.msra.mxu0 %v518
    %648 = vmatprep.subr.bf16.mxu0 %v521
    %649 = vmatpush1.bf16.msra.mxu0 %v520
    %650 = vmatprep.subr.bf16.mxu0 %v523
    %651 = vmatpush1.bf16.msra.mxu0 %v522
    %652 = vmatprep.subr.bf16.mxu0 %v525
    %653 = vmatpush1.bf16.msra.mxu0 %v524
    %654 = vmatprep.subr.bf16.mxu0 %v527
    %655 = vmatpush1.bf16.msra.mxu0 %v526
    %656 = vmatprep.subr.bf16.mxu0 %v529
    %657 = vmatpush1.bf16.msra.mxu0 %v528
    %658 = vmatprep.mubr.bf16.mxu0 %v231
    %659 = vmatmul.mubr.bf16.gmra.mrb[0].mxu0 %v230
    %v660 = vpop.f32.mrb[0].mxu0
    %v661 = vadd.f32 0.0, %v660
    %v662 = vpop.f32.mrb[0].mxu0
    %v663 = vadd.f32 0.0, %v662
    %v664 = vpop.f32.mrb[0].mxu0
    %v665 = vadd.f32 0.0, %v664
    %v666 = vpop.f32.mrb[0].mxu0
    %v667 = vadd.f32 0.0, %v666
    %668 = vmatprep.mubr.bf16.mxu0 %v233
    %669 = vmatmul.mubr.bf16.gmra.mrb[0].mxu0 %v232
    %v670 = vpop.f32.mrb[0].mxu0
    %v671 = vadd.f32 0.0, %v670
    %v672 = vpop.f32.mrb[0].mxu0
    %v673 = vadd.f32 0.0, %v672
    %v674 = vpop.f32.mrb[0].mxu0
    %v675 = vadd.f32 0.0, %v674
    %v676 = vpop.f32.mrb[0].mxu0
    %v677 = vadd.f32 0.0, %v676
    %678 = vmatprep.mubr.bf16.mxu0 %v235
    %679 = vmatmul.mubr.bf16.gmra.mrb[0].mxu0 %v234
    %v680 = vpop.f32.mrb[0].mxu0
    %v681 = vadd.f32 0.0, %v680
    %v682 = vpop.f32.mrb[0].mxu0
    %v683 = vadd.f32 0.0, %v682
    %v684 = vpop.f32.mrb[0].mxu0
    %v685 = vpop.f32.mrb[0].mxu0
    %686 = vdwg.mxu0
    %687 = vmatprep.subr.bf16.mxu0 %v531
    %688 = vmatpush1.bf16.msra.mxu0 %v530
    %689 = vmatprep.subr.bf16.mxu0 %v533
    %690 = vmatpush1.bf16.msra.mxu0 %v532
    %691 = vmatprep.subr.bf16.mxu0 %v535
    %692 = vmatpush1.bf16.msra.mxu0 %v534
    %693 = vmatprep.subr.bf16.mxu0 %v537
    %694 = vmatpush1.bf16.msra.mxu0 %v536
    %695 = vmatprep.subr.bf16.mxu0 %v539
    %696 = vmatpush1.bf16.msra.mxu0 %v538
    %697 = vmatprep.subr.bf16.mxu0 %v541
    %698 = vmatpush1.bf16.msra.mxu0 %v540
    %699 = vmatprep.subr.bf16.mxu0 %v543
    %700 = vmatpush1.bf16.msra.mxu0 %v542
    %701 = vmatprep.subr.bf16.mxu0 %v545
    %702 = vmatpush1.bf16.msra.mxu0 %v544
    %703 = vmatprep.subr.bf16.mxu0 %v547
    %704 = vmatpush1.bf16.msra.mxu0 %v546
    %705 = vmatprep.subr.bf16.mxu0 %v549
    %706 = vmatpush1.bf16.msra.mxu0 %v548
    %707 = vmatprep.subr.bf16.mxu0 %v551
    %708 = vmatpush1.bf16.msra.mxu0 %v550
    %709 = vmatprep.subr.bf16.mxu0 %v553
    %710 = vmatpush1.bf16.msra.mxu0 %v552
    %711 = vmatprep.subr.bf16.mxu0 %v555
    %712 = vmatpush1.bf16.msra.mxu0 %v554
    %713 = vmatprep.subr.bf16.mxu0 %v557
    %714 = vmatpush1.bf16.msra.mxu0 %v556
    %715 = vmatprep.subr.bf16.mxu0 %v559
    %716 = vmatpush1.bf16.msra.mxu0 %v558
    %717 = vmatprep.subr.bf16.mxu0 %v561
    %718 = vmatpush1.bf16.msra.mxu0 %v560
    %719 = vmatprep.mubr.bf16.mxu0 %v210
    %720 = vmatmul.mubr.bf16.gmra.mrb[0].mxu0 %v209
    %v721 = vpop.f32.mrb[0].mxu0
    %v722 = vadd.f32 %v661, %v721
    %v723 = vpop.f32.mrb[0].mxu0
    %v724 = vadd.f32 %v663, %v723
    %v725 = vpop.f32.mrb[0].mxu0
    %v726 = vadd.f32 %v665, %v725
    %v727 = vpop.f32.mrb[0].mxu0
    %v728 = vadd.f32 %v667, %v727
    %729 = vmatprep.mubr.bf16.mxu0 %v212
    %730 = vmatmul.mubr.bf16.gmra.mrb[0].mxu0 %v211
    %v731 = vpop.f32.mrb[0].mxu0
    %v732 = vadd.f32 %v671, %v731
    %v733 = vpop.f32.mrb[0].mxu0
    %v734 = vadd.f32 %v673, %v733
    %v735 = vpop.f32.mrb[0].mxu0
    %v736 = vadd.f32 %v675, %v735
    %v737 = vpop.f32.mrb[0].mxu0
    %v738 = vadd.f32 %v677, %v737
    %739 = vmatprep.mubr.bf16.mxu0 %v214
    %740 = vmatmul.mubr.bf16.gmra.mrb[0].mxu0 %v213
    %v741 = vpop.f32.mrb[0].mxu0
    %v742 = vadd.f32 %v681, %v741
    %v743 = vpop.f32.mrb[0].mxu0
    %v744 = vadd.f32 %v683, %v743
    %v745 = vpop.f32.mrb[0].mxu0
    %v746 = vpop.f32.mrb[0].mxu0
    %747 = vdwg.mxu0
    %748 = vst [vmem:[#allocation5] sm:$0xff] %v722
    %749 = vst [vmem:[#allocation5 + $0x8] sm:$0xff] %v724
    %750 = vst [vmem:[#allocation5 + $0x10] sm:$0xff] %v726
    %751 = vst [vmem:[#allocation5 + $0x18] sm:$0xff] %v728
    %752 = vst [vmem:[#allocation5 + $0x20] sm:$0xff] %v732
    %753 = vst [vmem:[#allocation5 + $0x28] sm:$0xff] %v734
    %754 = vst [vmem:[#allocation5 + $0x30] sm:$0xff] %v736
    %755 = vst [vmem:[#allocation5 + $0x38] sm:$0xff] %v738
    %756 = vst [vmem:[#allocation5 + $0x40] sm:$0xff] %v742
    %757 = vst [vmem:[#allocation5 + $0x48] sm:$0xff] %v744
    // Predicated region
    $region26: #{tpu_custom_call.1} parent=1 // pred_check
      _
    $region27: #{tpu_custom_call.1} parent=1 // pred_check_branch
      %759 = sbr.rel (0) target = $region29
    $region28: #{tpu_custom_call.1} parent=1 // pred_region
      %s761 = ssub.s32 1280, 1280
      %762 = vsyncadd [#allocation4], %s761
      %s763 = sshll.u32 [#allocation5], 4
      %s764 = int_to_ptr.vmem [resolvable:$true] %s763
      %769 = dma.vmem_to_hbm [thread:$0]  %s764, 1280, %s5, [#allocation4], 256, 256, 16
    $region29: #{tpu_custom_call.1} parent=1 // pred_fallthru
      _
    // Predicated region
    $region30: #{tpu_custom_call.1} parent=1 // pred_check
      _
    $region31: #{tpu_custom_call.1} parent=1 // pred_check_branch
      %771 = sbr.rel (0) target = $region33
    $region32: #{tpu_custom_call.1} parent=1 // pred_region
      %772 = dma.done [#allocation4], 1280
    $region33: #{tpu_custom_call.1} parent=1 // pred_fallthru
      _
    %773 = vsyncpa [#allocation3], 1
    %774 = vsyncpa [#allocation4], 1

</llo_original>
